<compile_context>
chip_gen: v7x
topology: tpu7x:2x2x1
jax: 0.10.0
libtpu: 0.0.40
codegen_flags: <defaults>
</compile_context>

<pallas_src>
import functools

import jax
import jax.numpy as jnp
from jax import lax
from jax.experimental import pallas as pl
from jax.experimental.pallas import tpu as pltpu


def _round_up(x, m):
    return (x + m - 1) // m * m


def _pick_vmem_limit_bytes():
    """Scoped-VMEM limit: hardware capacity with ~20% headroom (fallback 64 MiB)."""
    try:
        cap = int(pltpu.get_tpu_info().vmem_capacity_bytes)
    except Exception:
        cap = 64 * 1024 * 1024          # conservative: v7x per-core VMEM
    cap = min(max(cap, 32 * 1024 * 1024), 128 * 1024 * 1024)
    return int(cap * 0.8)


# ---------------------------------------------------------------------------
# Fused Pallas kernel: residual + attention, one (batch, query-tile) per step
# ---------------------------------------------------------------------------
def _residual_attn_kernel(x_ref, wqkv_ref, wout_ref, b_ref, o_ref,
                          kv_scr, q_scr, out_slab, *,
                          heads, dim_head, n_valid, tq):
    # x_ref:    (1, C, N_pad)     input, channels-first, spatially flattened
    # wqkv_ref: (C, 3*hidden)     bf16, transposed conv weight, scale folded in Q
    # wout_ref: (C, hidden)       bf16 conv weight (out_ch, in_ch)
    # b_ref:    (C, 1)            f32 conv bias
    # o_ref:    (1, C, tq)        output tile: attention(x) + x
    # kv_scr:   (2*hidden, N_pad) bf16 scratch: K rows then V rows (per batch b)
    # q_scr:    (hidden, tq)      bf16 scratch: Q projection of this query tile
    # out_slab: (hidden, tq)      bf16 scratch: per-head attention outputs
    hidden = heads * dim_head
    n_pad = x_ref.shape[2]
    qi = pl.program_id(1)

    # ---- K/V projection once per batch element (query tile 0) -------------
    @pl.when(qi == 0)
    def _():
        x_all = x_ref[0].astype(jnp.bfloat16)                     # (C, N_pad)
        w_kv = wqkv_ref[:, hidden:]                               # (C, 2*hidden)
        kv = lax.dot_general(w_kv, x_all, (((0,), (0,)), ((), ())),
                             preferred_element_type=jnp.float32)  # (2h, N_pad)
        kv_scr[...] = kv.astype(jnp.bfloat16)

    # ---- Q projection for this query tile (softmax scale pre-folded) ------
    q_start = pl.multiple_of(qi * tq, tq)
    x_tile = x_ref[0, :, pl.ds(q_start, tq)]                      # (C, tq)
    x_tile_bf = x_tile.astype(jnp.bfloat16)
    q = lax.dot_general(wqkv_ref[:, :hidden], x_tile_bf,
                        (((0,), (0,)), ((), ())),
                        preferred_element_type=jnp.float32)       # (hidden, tq)
    q_scr[...] = q.astype(jnp.bfloat16)

    # Static key-validity mask (only materialized if N was padded).
    key_valid = None
    if n_pad > n_valid:
        key_valid = lax.broadcasted_iota(jnp.int32, (n_pad, 1), 0) < n_valid

    # ---- Per-head attention; rolled loop bounds live ranges to one head ---
    @pl.loop(0, heads)
    def _(h):
        off = pl.multiple_of(h * dim_head, dim_head)
        q_h = q_scr[pl.ds(off, dim_head), :]                      # (dh, tq)
        k_h = kv_scr[pl.ds(off, dim_head), :]                     # (dh, N_pad)
        v_h = kv_scr[pl.ds(hidden + off, dim_head), :]            # (dh, N_pad)

        # sim[j, i] = sum_d k[d, j] * q_scaled[d, i]  -> (N_pad, tq).
        # Keeping the query index on the lane axis lets the (1, tq) softmax
        # stats broadcast against the (dh, tq) output with no lane moves.
        sim = lax.dot_general(k_h, q_h, (((0,), (0,)), ((), ())),
                              preferred_element_type=jnp.float32)
        if key_valid is not None:
            sim = jnp.where(key_valid, sim, -1e30)
        sim = sim - jnp.max(sim, axis=0, keepdims=True)
        p = jnp.exp(sim)                                          # f32 (v5e-safe)
        denom = jnp.sum(p, axis=0, keepdims=True)                 # (1, tq)

        # Deferred normalization: unnormalized p @ v, then one reciprocal
        # scale of the small (dh, tq) result (EUP slot, nearly free).
        out_h = lax.dot_general(v_h, p.astype(jnp.bfloat16),
                                (((1,), (0,)), ((), ())),
                                preferred_element_type=jnp.float32)
        out_h = out_h * pl.reciprocal(denom, approx=True)
        out_slab[pl.ds(off, dim_head), :] = out_h.astype(jnp.bfloat16)

    # ---- Single merged output projection (K = hidden) + bias + residual ---
    attn = lax.dot_general(wout_ref[...], out_slab[...],
                           (((1,), (0,)), ((), ())),
                           preferred_element_type=jnp.float32)    # (C, tq)
    y = x_tile.astype(jnp.float32) + b_ref[...] + attn
    o_ref[0] = y.astype(o_ref.dtype)


# ---------------------------------------------------------------------------
# Wrapper: single fused pallas_call; only free reshapes / tiny weight prep
# ---------------------------------------------------------------------------
def residual_attention_forward(x, w_qkv, w_out, b_out, *, heads, dim_head,
                               q_tile=256):
    """x: (B, C, H, W, D). Returns Attention(x) + x, same shape/dtype."""
    B, C, H, W, D = x.shape
    N = H * W * D
    hidden = heads * dim_head
    scale = dim_head ** (-0.5)

    # Lane-dense query tiling: tq is a multiple of 128 and N is padded up to
    # a multiple of tq, so every output store is a full-lane vst.
    tq = min(q_tile, _round_up(N, 128))
    n_pad = _round_up(N, tq)
    num_q = n_pad // tq

    xf = x.reshape(B, C, N)                        # free reshape, native dtype
    if n_pad != N:
        xf = jnp.pad(xf, ((0, 0), (0, 0), (0, n_pad - N)))

    # Fold the softmax scale into the Q rows, transpose to (C, 3*hidden) so
    # the weight's lane dim is 3*hidden, pre-cast the heavy operands to bf16.
    w_q, w_k, w_v = jnp.split(w_qkv.astype(jnp.float32), 3, axis=0)
    wqkv_t = jnp.concatenate([w_q * scale, w_k, w_v], axis=0).T
    wqkv_t = wqkv_t.astype(jnp.bfloat16)           # (C, 3*hidden)
    wout_bf = w_out.astype(jnp.bfloat16)           # (C, hidden)
    bias = b_out.reshape(C, 1).astype(jnp.float32)

    kern = functools.partial(_residual_attn_kernel, heads=heads,
                             dim_head=dim_head, n_valid=N, tq=tq)

    y = pl.pallas_call(
        kern,
        out_shape=jax.ShapeDtypeStruct((B, C, n_pad), x.dtype),
        grid_spec=pltpu.PrefetchScalarGridSpec(
            num_scalar_prefetch=0,
            grid=(B, num_q),
            in_specs=[
                pl.BlockSpec((1, C, n_pad), lambda b, qi: (b, 0, 0)),
                pl.BlockSpec((C, 3 * hidden), lambda b, qi: (0, 0)),
                pl.BlockSpec((C, hidden), lambda b, qi: (0, 0)),
                pl.BlockSpec((C, 1), lambda b, qi: (0, 0)),
            ],
            out_specs=pl.BlockSpec((1, C, tq), lambda b, qi: (b, 0, qi)),
            scratch_shapes=[
                pltpu.VMEM((2 * hidden, n_pad), jnp.bfloat16),   # K/V slab
                pltpu.VMEM((hidden, tq), jnp.bfloat16),          # Q tile
                pltpu.VMEM((hidden, tq), jnp.bfloat16),          # head outputs
            ]),
        compiler_params=pltpu.CompilerParams(
            dimension_semantics=("parallel", "arbitrary"),
            vmem_limit_bytes=_pick_vmem_limit_bytes()),
    )(xf, wqkv_t, wout_bf, bias)

    if n_pad != N:
        y = y[:, :, :N]
    return y.reshape(B, C, H, W, D)


# ---------------------------------------------------------------------------
# Pure-JAX reference (torch-style math, f32) for validation
# ---------------------------------------------------------------------------
def reference_forward(x, w_qkv, w_out, b_out, *, heads, dim_head):
    B, C, H, W, D = x.shape
    N = H * W * D
    hidden = heads * dim_head
    scale = dim_head ** (-0.5)
    xf = x.reshape(B, C, N).astype(jnp.float32)
    qkv = jnp.einsum("oc,bcn->bon", w_qkv, xf)
    q, k, v = jnp.split(qkv, 3, axis=1)
    rs = lambda t: t.reshape(B, heads, dim_head, N)
    q, k, v = map(rs, (q, k, v))
    q = q * scale
    sim = jnp.einsum("bhdi,bhdj->bhij", q, k)
    sim = sim - jnp.max(sim, axis=-1, keepdims=True)
    attn = jax.nn.softmax(sim, axis=-1)
    out = jnp.einsum("bhij,bhdj->bhid", attn, v)           # (B, h, N, d)
    out = out.transpose(0, 1, 3, 2).reshape(B, hidden, N)  # head-major channels
    y = jnp.einsum("oc,bcn->bon", w_out, out) + b_out[None, :, None]
    return y.reshape(B, C, H, W, D) + x                    # Residual: fn(x) + x


# ---------------------------------------------------------------------------
if __name__ == "__main__":
    # Attention config (module defaults): heads=4, dim_head=32
    dim, heads, dim_head = 8, 4, 32
    hidden = heads * dim_head
    B, H, W, D = 2, 4, 4, 4

    key = jax.random.PRNGKey(0)
    k_x, k_qkv, k_out, k_b = jax.random.split(key, 4)

    x = jax.random.normal(k_x, (B, dim, H, W, D), dtype=jnp.float32)
    # Conv3d weights (out_ch, in_ch, 1, 1, 1) stored squeezed to (out_ch, in_ch)
    w_qkv = 0.05 * jax.random.normal(k_qkv, (3 * hidden, dim), dtype=jnp.float32)
    w_out = 0.05 * jax.random.normal(k_out, (dim, hidden), dtype=jnp.float32)
    b_out = 0.05 * jax.random.normal(k_b, (dim,), dtype=jnp.float32)

    y = residual_attention_forward(x, w_qkv, w_out, b_out,
                                   heads=heads, dim_head=dim_head)
    y = jax.block_until_ready(y)

    y_ref = reference_forward(x, w_qkv, w_out, b_out,
                              heads=heads, dim_head=dim_head)
    assert y.shape == (B, dim, H, W, D)
    max_err = float(jnp.max(jnp.abs(y - y_ref)))
    # bf16 MXU matmuls + approx reciprocal vs f32 reference -> loose-ish tol.
    assert max_err < 2e-2, f"mismatch vs reference (max abs err {max_err})"

    print("KERNEL_OK")
</pallas_src>

<mosaic_0001>
module attributes {stable_mosaic.version = 11 : i64} {
  func.func @_residual_attn_kernel(%arg0: i32, %arg1: i32, %arg2: memref<1x8x128xf32, #tpu.memory_space<vmem>>, %arg3: memref<8x384xbf16, #tpu.memory_space<vmem>>, %arg4: memref<8x128xbf16, #tpu.memory_space<vmem>>, %arg5: memref<8x1xf32, #tpu.memory_space<vmem>>, %arg6: memref<1x8x128xf32, #tpu.memory_space<vmem>>, %arg7: memref<256x128xbf16, #tpu.memory_space<vmem>>, %arg8: memref<128x128xbf16, #tpu.memory_space<vmem>>, %arg9: memref<128x128xbf16, #tpu.memory_space<vmem>>) attributes {dimension_semantics = [#tpu.dimension_semantics<parallel>, #tpu.dimension_semantics<arbitrary>], iteration_bounds = array<i64: 2, 1>, scalar_prefetch = 0 : i64, scratch_operands = 3 : i64, tpu.core_type = #tpu.core_type<tc>, window_params = [{transform_indices = @transform_0, window_bounds = array<i64: 1, 8, 128>}, {pipeline_mode = #tpu.pipeline_mode<synchronous>, transform_indices = @transform_1, window_bounds = array<i64: 8, 384>}, {pipeline_mode = #tpu.pipeline_mode<synchronous>, transform_indices = @transform_2, window_bounds = array<i64: 8, 128>}, {pipeline_mode = #tpu.pipeline_mode<synchronous>, transform_indices = @transform_3, window_bounds = array<i64: 8, 1>}, {transform_indices = @transform_4, window_bounds = array<i64: 1, 8, 128>}]} {
    %c0_i32 = arith.constant 0 : i32
    %0 = arith.cmpi eq, %arg1, %c0_i32 : i32
    %1 = arith.extui %0 : i1 to i32
    %c0_i32_0 = arith.constant 0 : i32
    %2 = arith.cmpi ne, %1, %c0_i32_0 : i32
    scf.if %2 {
      %c0_18 = arith.constant 0 : index
      %c0_19 = arith.constant 0 : index
      %c0_20 = arith.constant 0 : index
      %27 = vector.load %arg2[%c0_18, %c0_19, %c0_20] : memref<1x8x128xf32, #tpu.memory_space<vmem>>, vector<1x8x128xf32>
      %28 = vector.shape_cast %27 : vector<1x8x128xf32> to vector<8x128xf32>
      %29 = arith.truncf %28 : vector<8x128xf32> to vector<8x128xbf16>
      %c0_21 = arith.constant 0 : index
      %c128 = arith.constant 128 : index
      %30 = vector.load %arg3[%c0_21, %c128] : memref<8x384xbf16, #tpu.memory_space<vmem>>, vector<8x256xbf16>
      %cst_22 = arith.constant dense<0.000000e+00> : vector<256x128xf32>
      %31 = tpu.matmul %30, %29, %cst_22 {dimension_numbers = #tpu.dot_dimension_numbers<[0], [0], [1], [1], [0, 1, 1, 1], [], []>} : vector<8x256xbf16>, vector<8x128xbf16>, vector<256x128xf32> -> vector<256x128xf32>
      %32 = arith.truncf %31 : vector<256x128xf32> to vector<256x128xbf16>
      %c0_23 = arith.constant 0 : index
      %c0_24 = arith.constant 0 : index
      %33 = vector.load %arg7[%c0_23, %c0_24] : memref<256x128xbf16, #tpu.memory_space<vmem>>, vector<256x128xbf16>
      tpu.vector_store %arg7[%c0_23, %c0_24], %32 {strides = array<i32>} : memref<256x128xbf16, #tpu.memory_space<vmem>>, vector<256x128xbf16>,
    } else {
    }
    %c128_i32 = arith.constant 128 : i32
    %3 = arith.muli %arg1, %c128_i32 : i32
    %4 = tpu.assume_multiple %3, 128 : i32
    %c0 = arith.constant 0 : index
    %c0_1 = arith.constant 0 : index
    %5 = arith.index_cast %4 : i32 to index
    %6 = vector.load %arg2[%c0, %c0_1, %5] : memref<1x8x128xf32, #tpu.memory_space<vmem>>, vector<1x8x128xf32>
    %7 = vector.shape_cast %6 : vector<1x8x128xf32> to vector<8x128xf32>
    %8 = arith.truncf %7 : vector<8x128xf32> to vector<8x128xbf16>
    %c0_2 = arith.constant 0 : index
    %c0_3 = arith.constant 0 : index
    %9 = vector.load %arg3[%c0_2, %c0_3] : memref<8x384xbf16, #tpu.memory_space<vmem>>, vector<8x128xbf16>
    %cst = arith.constant dense<0.000000e+00> : vector<128x128xf32>
    %10 = tpu.matmul %9, %8, %cst {dimension_numbers = #tpu.dot_dimension_numbers<[0], [0], [1], [1], [0, 1, 1, 1], [], []>} : vector<8x128xbf16>, vector<8x128xbf16>, vector<128x128xf32> -> vector<128x128xf32>
    %11 = arith.truncf %10 : vector<128x128xf32> to vector<128x128xbf16>
    %c0_4 = arith.constant 0 : index
    %c0_5 = arith.constant 0 : index
    %12 = vector.load %arg8[%c0_4, %c0_5] : memref<128x128xbf16, #tpu.memory_space<vmem>>, vector<128x128xbf16>
    tpu.vector_store %arg8[%c0_4, %c0_5], %11 {strides = array<i32>} : memref<128x128xbf16, #tpu.memory_space<vmem>>, vector<128x128xbf16>,
    %13 = tpu.iota {dimensions = array<i32: 0>} : vector<128x1xi32>
    %c64_i32 = arith.constant 64 : i32
    %14 = vector.broadcast %c64_i32 : i32 to vector<128x1xi32>
    %15 = arith.cmpi slt, %13, %14 : vector<128x1xi32>
    %c0_i32_6 = arith.constant 0 : i32
    %c4_i32 = arith.constant 4 : i32
    %16 = arith.addi %c0_i32_6, %c4_i32 : i32
    %c1_i32 = arith.constant 1 : i32
    scf.for %arg10 = %c0_i32_6 to %16 step %c1_i32  : i32 {
      %c1_i32_18 = arith.constant 1 : i32
      %27 = arith.muli %arg10, %c1_i32_18 : i32
      %c0_i32_19 = arith.constant 0 : i32
      %28 = arith.addi %c0_i32_19, %27 : i32
      %c32_i32 = arith.constant 32 : i32
      %29 = arith.muli %28, %c32_i32 : i32
      %30 = tpu.assume_multiple %29, 32 : i32
      %31 = arith.index_cast %30 : i32 to index
      %c0_20 = arith.constant 0 : index
      %32 = vector.load %arg8[%31, %c0_20] : memref<128x128xbf16, #tpu.memory_space<vmem>>, vector<32x128xbf16>
      %33 = arith.index_cast %30 : i32 to index
      %c0_21 = arith.constant 0 : index
      %34 = vector.load %arg7[%33, %c0_21] : memref<256x128xbf16, #tpu.memory_space<vmem>>, vector<32x128xbf16>
      %c128_i32_22 = arith.constant 128 : i32
      %35 = arith.addi %c128_i32_22, %30 : i32
      %36 = arith.index_cast %35 : i32 to index
      %c0_23 = arith.constant 0 : index
      %37 = vector.load %arg7[%36, %c0_23] : memref<256x128xbf16, #tpu.memory_space<vmem>>, vector<32x128xbf16>
      %cst_24 = arith.constant dense<0.000000e+00> : vector<128x128xf32>
      %38 = tpu.matmul %34, %32, %cst_24 {dimension_numbers = #tpu.dot_dimension_numbers<[0], [0], [1], [1], [0, 1, 1, 1], [], []>} : vector<32x128xbf16>, vector<32x128xbf16>, vector<128x128xf32> -> vector<128x128xf32>
      %cst_25 = arith.constant -1.000000e+30 : f32
      %39 = vector.shape_cast %15 : vector<128x1xi1> to vector<128x1xi1>
      %40 = vector.broadcast %39 : vector<128x1xi1> to vector<128x128xi1>
      %41 = vector.broadcast %cst_25 : f32 to vector<128x128xf32>
      %42 = arith.select %40, %38, %41 : vector<128x128xi1>, vector<128x128xf32>
      %cst_26 = arith.constant dense<0xFF800000> : vector<128xf32>
      %43 = vector.multi_reduction <maximumf>, %42, %cst_26 [0] : vector<128x128xf32> to vector<128xf32>
      %44 = vector.shape_cast %43 : vector<128xf32> to vector<1x128xf32>
      %45 = vector.broadcast %44 : vector<1x128xf32> to vector<128x128xf32>
      %46 = arith.subf %42, %45 : vector<128x128xf32>
      %47 = math.exp %46 : vector<128x128xf32>
      %cst_27 = arith.constant dense<0.000000e+00> : vector<128xf32>
      %48 = vector.multi_reduction <add>, %47, %cst_27 [0] : vector<128x128xf32> to vector<128xf32>
      %49 = vector.shape_cast %48 : vector<128xf32> to vector<1x128xf32>
      %50 = arith.truncf %47 : vector<128x128xf32> to vector<128x128xbf16>
      %cst_28 = arith.constant dense<0.000000e+00> : vector<32x128xf32>
      %51 = tpu.matmul %37, %50, %cst_28 {dimension_numbers = #tpu.dot_dimension_numbers<[1], [0], [0], [1], [0, 0, 1, 1], [], []>} : vector<32x128xbf16>, vector<128x128xbf16>, vector<32x128xf32> -> vector<32x128xf32>
      %52 = tpu.reciprocal %49 {approx = true} : vector<1x128xf32> -> vector<1x128xf32>
      %53 = vector.broadcast %52 : vector<1x128xf32> to vector<32x128xf32>
      %54 = arith.mulf %51, %53 : vector<32x128xf32>
      %55 = arith.truncf %54 : vector<32x128xf32> to vector<32x128xbf16>
      %56 = arith.index_cast %30 : i32 to index
      %c0_29 = arith.constant 0 : index
      %57 = vector.load %arg9[%56, %c0_29] : memref<128x128xbf16, #tpu.memory_space<vmem>>, vector<32x128xbf16>
      tpu.vector_store %arg9[%56, %c0_29], %55 {strides = array<i32>} : memref<128x128xbf16, #tpu.memory_space<vmem>>, vector<32x128xbf16>,
    }
    %c4_i32_7 = arith.constant 4 : i32
    %c0_8 = arith.constant 0 : index
    %c0_9 = arith.constant 0 : index
    %17 = vector.load %arg4[%c0_8, %c0_9] : memref<8x128xbf16, #tpu.memory_space<vmem>>, vector<8x128xbf16>
    %c0_10 = arith.constant 0 : index
    %c0_11 = arith.constant 0 : index
    %18 = vector.load %arg9[%c0_10, %c0_11] : memref<128x128xbf16, #tpu.memory_space<vmem>>, vector<128x128xbf16>
    %cst_12 = arith.constant dense<0.000000e+00> : vector<8x128xf32>
    %19 = tpu.matmul %17, %18, %cst_12 {dimension_numbers = #tpu.dot_dimension_numbers<[1], [0], [0], [1], [0, 0, 1, 1], [], []>} : vector<8x128xbf16>, vector<128x128xbf16>, vector<8x128xf32> -> vector<8x128xf32>
    %c0_13 = arith.constant 0 : index
    %c0_14 = arith.constant 0 : index
    %20 = vector.load %arg5[%c0_13, %c0_14] : memref<8x1xf32, #tpu.memory_space<vmem>>, vector<8x1xf32>
    %21 = vector.broadcast %20 : vector<8x1xf32> to vector<8x128xf32>
    %22 = arith.addf %7, %21 : vector<8x128xf32>
    %23 = arith.addf %22, %19 : vector<8x128xf32>
    %c0_15 = arith.constant 0 : index
    %c0_16 = arith.constant 0 : index
    %c0_17 = arith.constant 0 : index
    %24 = vector.load %arg6[%c0_15, %c0_16, %c0_17] : memref<1x8x128xf32, #tpu.memory_space<vmem>>, vector<1x8x128xf32>
    %25 = vector.shape_cast %24 : vector<1x8x128xf32> to vector<8x128xf32>
    %26 = vector.shape_cast %23 : vector<8x128xf32> to vector<1x8x128xf32>
    tpu.vector_store %arg6[%c0_15, %c0_16, %c0_17], %26 {strides = array<i32>} : memref<1x8x128xf32, #tpu.memory_space<vmem>>, vector<1x8x128xf32>,
    return
  }
  func.func @transform_0(%arg0: i32, %arg1: i32) -> (i32, i32, i32) {
    %c0_i32 = arith.constant 0 : i32
    %c0_i32_0 = arith.constant 0 : i32
    %c0_i32_1 = arith.constant 0 : i32
    return %arg0, %c0_i32, %c0_i32_0 : i32, i32, i32
  }
  func.func @transform_1(%arg0: i32, %arg1: i32) -> (i32, i32) {
    %c0_i32 = arith.constant 0 : i32
    %c0_i32_0 = arith.constant 0 : i32
    %c0_i32_1 = arith.constant 0 : i32
    return %c0_i32, %c0_i32_0 : i32, i32
  }
  func.func @transform_2(%arg0: i32, %arg1: i32) -> (i32, i32) {
    %c0_i32 = arith.constant 0 : i32
    %c0_i32_0 = arith.constant 0 : i32
    %c0_i32_1 = arith.constant 0 : i32
    return %c0_i32, %c0_i32_0 : i32, i32
  }
  func.func @transform_3(%arg0: i32, %arg1: i32) -> (i32, i32) {
    %c0_i32 = arith.constant 0 : i32
    %c0_i32_0 = arith.constant 0 : i32
    %c0_i32_1 = arith.constant 0 : i32
    return %c0_i32, %c0_i32_0 : i32, i32
  }
  func.func @transform_4(%arg0: i32, %arg1: i32) -> (i32, i32, i32) {
    %c0_i32 = arith.constant 0 : i32
    %c0_i32_0 = arith.constant 0 : i32
    return %arg0, %c0_i32, %arg1 : i32, i32, i32
  }
}

</mosaic_0001>

<llo_original>
// kernel: tpu_custom_call.1
$region0: #{tpu_custom_call.1}
  #allocation0 [shape = 'u32[]', space=smem, size = 0x4, offset = 0x4, fixed_abs, tag = 'smem constant byte address 0x4 - core index']
  #allocation1 [shape = 'u32[144,128]{1,0:T(1,128)}', space=vmem, size = 0x12000, scoped, tag = 'internal scratch']
  #allocation2 [shape = 'bf16[256,128]{1,0:T(16,128)(2,1)}', space=vmem, size = 0x10000, scoped, tag = 'scratch operand']
  #allocation3 [shape = 'bf16[128,128]{1,0:T(16,128)(2,1)}', space=vmem, size = 0x8000, scoped, tag = 'scratch operand']
  #allocation4 [shape = 'bf16[128,128]{1,0:T(16,128)(2,1)}', space=vmem, size = 0x8000, scoped, tag = 'scratch operand']
  %s0 = inlined_call_operand.hbm [shape: f32[2,8,128], index: 0, kind: input, shape index: {}]
  %s1 = inlined_call_operand.vmem [shape: bf16[8,384], index: 1, kind: input, shape index: {}]
  %s2 = inlined_call_operand.vmem [shape: bf16[8,128], index: 2, kind: input, shape index: {}]
  %s3 = inlined_call_operand.vmem [shape: f32[8,1], index: 3, kind: input, shape index: {}]
  %s4 = inlined_call_operand.hbm [shape: f32[2,8,128], index: 4, kind: output, shape index: {}]
  %s5 = sld [smem:[#allocation0]]
  $region64: #{tpu_custom_call.1} parent=0
    _
  %s7 = ssub.s32 1, %s5
  %s8 = scalar_select 0, %s7, %s5
  $region1: #{tpu_custom_call.1} parent=0
    #allocation5 [shape = 'u8[8192]{0}', space=vmem, size = 0x2000, scoped, tag = 'input window, operand 0']
    #allocation6 [shape = 's32[2]{0}', space=sflag, size = 0x8, scoped, tag = 'scoped memory for tpu_custom_call.1']
    #allocation7 [shape = 's32[2]{0}', space=sflag, size = 0x8, scoped, tag = 'scoped memory for tpu_custom_call.1']
    #allocation8 [shape = 'u8[8192]{0}', space=vmem, size = 0x2000, scoped, tag = 'output window, operand 0']
    %9 = vsyncpa [#allocation6], 0
    %s10 = scalar_lea.sflag [#allocation6], 1
    %11 = vsyncpa %s10, 0
    %12 = vsyncpa [#allocation7], 0
    %s13 = scalar_lea.sflag [#allocation7], 1
    %14 = vsyncpa %s13, 0
    loop: start=0, step=1, limit=4
    $region2: #{tpu_custom_call.1} parent=1 // loop_pre_header
      _
    $region3: #{tpu_custom_call.1} parent=1 // loop_header
      %s16 = sphi 0, %s20
      %p17 = scmp.ge.s32.totalorder %s16, 4
      %s23 = sphi 0, %s35
      %s24 = sphi 0, %s31
      %s25 = sphi 0, %s23
      %s26 = sphi 0, %s24
      %s27 = sphi 0, %s25
      %s28 = sphi 0, %s26
      %s38 = sphi 0, %s40
      %s41 = sphi 0, %s38
      %s42 = sphi 0, %s41
      %s58 = sphi 0, %s42
      %s62 = sphi 0, %s62
      %s64 = sphi 0, %s62
      %s65 = sphi 0, %s64
      %s79 = sphi 0, %s65
      %s83 = sphi 0, %s83
      %s85 = sphi 0, %s83
      %s86 = sphi 0, %s85
      %s100 = sphi 0, %s86
      %s104 = sphi 0, %s104
      %s106 = sphi 0, %s104
      %s107 = sphi 0, %s106
      %s121 = sphi 0, %s107
      %s129 = sphi 0, %s131
      %s132 = sphi 0, %s129
      %s133 = sphi 0, %s132
      %s149 = sphi 0, %s133
    $region4: #{tpu_custom_call.1} parent=1 // loop_header_branch
      %19 = sbr.rel (%p17) target = $region8
    $region5: #{tpu_custom_call.1} parent=1 // loop_body
      %s21 = ssub.s32 %s16, 1
      %s22 = ssub.s32 %s16, 2
      %s29 = sadd.s32 1, %s24
      %p30 = scmp.ge.s32.totalorder %s29, 1
      %s31 = scalar_select %p30, 0, %s29
      %s32 = sadd.s32 1, %s23
      %s33 = scalar_select %p30, %s32, %s23
      %p34 = scmp.ge.s32.totalorder %s33, 2
      %s35 = scalar_select %p34, 0, %s33
      %s36 = ssub.s32 %s23, %s35
      %p37 = scmp.eq.s32.totalorder %s36, 0
      %s39 = sadd.s32 %s38, 1
      %s40 = scalar_select %p37, %s38, %s39
      %p43 = pneg %p37
      %p44 = scmp.eq.s32.totalorder %s16, 1
      %p45 = por %p43, %p44
      %p46 = scmp.ne.s32.totalorder %s38, %s41
      %p47 = scmp.eq.s32.totalorder %s16, 0
      %p48 = por %p46, %p47
      %p49 = scmp.ne.s32.totalorder %s38, %s41
      %p50 = scmp.eq.s32.totalorder %s21, 1
      %p51 = por %p49, %p50
      %p52 = scmp.ne.s32.totalorder %s41, %s42
      %p53 = scmp.eq.s32.totalorder %s21, 0
      %p54 = por %p52, %p53
      %p55 = scmp.ne.s32.totalorder %s41, %s42
      %p56 = scmp.eq.s32.totalorder %s22, 1
      %p57 = por %p55, %p56
      %p59 = scmp.ne.s32.totalorder %s42, %s58
      %p60 = scmp.eq.s32.totalorder %s22, 0
      %p61 = por %p59, %p60
      %s63 = sadd.s32 %s62, 1
      %p66 = scmp.eq.s32.totalorder %s16, 1
      %p67 = scmp.ne.s32.totalorder %s62, %s64
      %p68 = scmp.eq.s32.totalorder %s16, 0
      %p69 = por %p67, %p68
      %p70 = scmp.ne.s32.totalorder %s62, %s64
      %p71 = scmp.eq.s32.totalorder %s21, 1
      %p72 = por %p70, %p71
      %p73 = scmp.ne.s32.totalorder %s64, %s65
      %p74 = scmp.eq.s32.totalorder %s21, 0
      %p75 = por %p73, %p74
      %p76 = scmp.ne.s32.totalorder %s64, %s65
      %p77 = scmp.eq.s32.totalorder %s22, 1
      %p78 = por %p76, %p77
      %p80 = scmp.ne.s32.totalorder %s65, %s79
      %p81 = scmp.eq.s32.totalorder %s22, 0
      %p82 = por %p80, %p81
      %s84 = sadd.s32 %s83, 1
      %p87 = scmp.eq.s32.totalorder %s16, 1
      %p88 = scmp.ne.s32.totalorder %s83, %s85
      %p89 = scmp.eq.s32.totalorder %s16, 0
      %p90 = por %p88, %p89
      %p91 = scmp.ne.s32.totalorder %s83, %s85
      %p92 = scmp.eq.s32.totalorder %s21, 1
      %p93 = por %p91, %p92
      %p94 = scmp.ne.s32.totalorder %s85, %s86
      %p95 = scmp.eq.s32.totalorder %s21, 0
      %p96 = por %p94, %p95
      %p97 = scmp.ne.s32.totalorder %s85, %s86
      %p98 = scmp.eq.s32.totalorder %s22, 1
      %p99 = por %p97, %p98
      %p101 = scmp.ne.s32.totalorder %s86, %s100
      %p102 = scmp.eq.s32.totalorder %s22, 0
      %p103 = por %p101, %p102
      %s105 = sadd.s32 %s104, 1
      %p108 = scmp.eq.s32.totalorder %s16, 1
      %p109 = scmp.ne.s32.totalorder %s104, %s106
      %p110 = scmp.eq.s32.totalorder %s16, 0
      %p111 = por %p109, %p110
      %p112 = scmp.ne.s32.totalorder %s104, %s106
      %p113 = scmp.eq.s32.totalorder %s21, 1
      %p114 = por %p112, %p113
      %p115 = scmp.ne.s32.totalorder %s106, %s107
      %p116 = scmp.eq.s32.totalorder %s21, 0
      %p117 = por %p115, %p116
      %p118 = scmp.ne.s32.totalorder %s106, %s107
      %p119 = scmp.eq.s32.totalorder %s22, 1
      %p120 = por %p118, %p119
      %p122 = scmp.ne.s32.totalorder %s107, %s121
      %p123 = scmp.eq.s32.totalorder %s22, 0
      %p124 = por %p122, %p123
      %s125 = ssub.s32 %s23, %s35
      %s126 = ssub.s32 %s24, %s31
      %s127 = sor.u32 %s125, %s126
      %p128 = scmp.eq.s32.totalorder %s127, 0
      %s130 = sadd.s32 %s129, 1
      %s131 = scalar_select %p128, %s129, %s130
      %p134 = pneg %p128
      %p135 = scmp.eq.s32.totalorder %s16, 1
      %p136 = por %p134, %p135
      %p137 = scmp.ne.s32.totalorder %s129, %s132
      %p138 = scmp.eq.s32.totalorder %s16, 0
      %p139 = por %p137, %p138
      %p140 = scmp.ne.s32.totalorder %s129, %s132
      %p141 = scmp.eq.s32.totalorder %s21, 1
      %p142 = por %p140, %p141
      %p143 = scmp.ne.s32.totalorder %s132, %s133
      %p144 = scmp.eq.s32.totalorder %s21, 0
      %p145 = por %p143, %p144
      %p146 = scmp.ne.s32.totalorder %s132, %s133
      %p147 = scmp.eq.s32.totalorder %s22, 1
      %p148 = por %p146, %p147
      %p150 = scmp.ne.s32.totalorder %s133, %s149
      %p151 = scmp.eq.s32.totalorder %s22, 0
      %p152 = por %p150, %p151
      %p153 = scmp.le.s32.totalorder 1, %s16
      %p154 = scmp.lt.s32.totalorder %s16, 3
      %p155 = pnand %p153, %p154
      %p156 = pneg %p155
      // Predicated region
      $region9: #{tpu_custom_call.1} parent=5 // pred_check
        _
      $region10: #{tpu_custom_call.1} parent=5 // pred_check_branch
        %158 = sbr.rel (%p155) target = $region12
      $region11: #{tpu_custom_call.1} parent=5 // pred_region
        %s159 = ssub.s32 %s16, 1
        // Predicated region
        $region13: #{tpu_custom_call.1} parent=11 // pred_check
          %p160 = pneg %p75
        $region14: #{tpu_custom_call.1} parent=11 // pred_check_branch
          %162 = sbr.rel (%p160) target = $region16
        $region15: #{tpu_custom_call.1} parent=11 // pred_region
          _
        $region16: #{tpu_custom_call.1} parent=11 // pred_fallthru
          _
        // Predicated region
        $region17: #{tpu_custom_call.1} parent=11 // pred_check
          %p163 = pneg %p96
        $region18: #{tpu_custom_call.1} parent=11 // pred_check_branch
          %165 = sbr.rel (%p163) target = $region20
        $region19: #{tpu_custom_call.1} parent=11 // pred_region
          _
        $region20: #{tpu_custom_call.1} parent=11 // pred_fallthru
          _
        // Predicated region
        $region21: #{tpu_custom_call.1} parent=11 // pred_check
          %p166 = pneg %p117
        $region22: #{tpu_custom_call.1} parent=11 // pred_check_branch
          %168 = sbr.rel (%p166) target = $region24
        $region23: #{tpu_custom_call.1} parent=11 // pred_region
          _
        $region24: #{tpu_custom_call.1} parent=11 // pred_fallthru
          _
      $region12: #{tpu_custom_call.1} parent=5 // pred_fallthru
        _
      %p169 = scmp.lt.s32.totalorder %s16, 2
      // Predicated region
      $region25: #{tpu_custom_call.1} parent=5 // pred_check
        %p170 = pneg %p169
      $region26: #{tpu_custom_call.1} parent=5 // pred_check_branch
        %172 = sbr.rel (%p170) target = $region28
      $region27: #{tpu_custom_call.1} parent=5 // pred_region
        // Predicated region
        $region29: #{tpu_custom_call.1} parent=27 // pred_check
          %p173 = pneg %p48
        $region30: #{tpu_custom_call.1} parent=27 // pred_check_branch
          %175 = sbr.rel (%p173) target = $region32
        $region31: #{tpu_custom_call.1} parent=27 // pred_region
          %s176 = sand.u32 %s38, 1
          %s177 = scalar_lea.sflag [#allocation6], %s176
          %s178 = sand.u32 %s38, 1
          %s179 = smul.addr %s178, 8
          %s180 = scalar_lea.vmem [#allocation5], %s179
          %s182 = ssub.s32 128, 128
          %183 = vsyncadd %s177, %s182
          %s184 = smul.addr %s23, 128
          %s185 = scalar_lea.hbm %s0, %s184
          %s187 = sshll.u32 %s180, 4
          %s188 = int_to_ptr.vmem [resolvable:$true] %s187
          %190 = dma.hbm_to_vmem [thread:$0]  %s185, 128, %s188, %s177
        $region32: #{tpu_custom_call.1} parent=27 // pred_fallthru
          _
      $region28: #{tpu_custom_call.1} parent=5 // pred_fallthru
        _
      %p191 = scmp.le.s32.totalorder 1, %s16
      %p192 = scmp.lt.s32.totalorder %s16, 3
      %p193 = pnand %p191, %p192
      %p194 = pneg %p193
      // Predicated region
      $region33: #{tpu_custom_call.1} parent=5 // pred_check
        _
      $region34: #{tpu_custom_call.1} parent=5 // pred_check_branch
        %196 = sbr.rel (%p193) target = $region36
      $region35: #{tpu_custom_call.1} parent=5 // pred_region
        %s197 = ssub.s32 %s16, 1
        %s198 = sand.u32 %s41, 1
        %s199 = scalar_lea.sflag [#allocation6], %s198
        %s200 = sand.u32 %s41, 1
        %s201 = smul.addr %s200, 8
        %s202 = scalar_lea.vmem [#allocation5], %s201
        // Predicated region
        $region37: #{tpu_custom_call.1} parent=35 // pred_check
          %p203 = pneg %p54
        $region38: #{tpu_custom_call.1} parent=35 // pred_check_branch
          %205 = sbr.rel (%p203) target = $region40
        $region39: #{tpu_custom_call.1} parent=35 // pred_region
          %206 = dma.done %s199, 128
        $region40: #{tpu_custom_call.1} parent=35 // pred_fallthru
          _
        %s207 = sand.u32 %s41, 1
        %s208 = scalar_lea.sflag [#allocation6], %s207
        %s209 = sand.u32 %s41, 1
        %s210 = smul.addr %s209, 8
        %s211 = scalar_lea.vmem [#allocation5], %s210
        %p212 = pneg %p54
        %p213 = pneg %p51
        %p214 = pneg %p75
        %p215 = pneg %p72
        %p216 = pneg %p96
        %p217 = pneg %p93
        %p218 = pneg %p117
        %p219 = pneg %p114
        %p220 = pneg %p145
        %p221 = pneg %p142
        %s222 = sand.u32 %s132, 1
        %s223 = scalar_lea.sflag [#allocation7], %s222
        %s224 = sand.u32 %s132, 1
        %s225 = smul.addr %s224, 8
        %s226 = scalar_lea.vmem [#allocation8], %s225
        %p228 = scmp.eq.s32.totalorder %s26, 0
        // Predicated region
        $region41: #{tpu_custom_call.1} parent=35 // pred_check
          %p229 = pneg %p228
        $region42: #{tpu_custom_call.1} parent=35 // pred_check_branch
          %231 = sbr.rel (%p229) target = $region44
        $region43: #{tpu_custom_call.1} parent=35 // pred_region
          %v232 = vld [vmem:[%s202] sm:$0xff]
          %v233 = vpack.c.bf16 %v232, %v232
          %v234 = vld [vmem:[%s1 + $0x4] sm:$0xff]
          %v236 = vunpack.c.l.b16 %v234
          %v237 = vunpack.c.h.b16 %v234
          %v238 = vpack.c.b16 %v236, %v236
          %v239 = vpack.c.b16 %v237, %v237
          %242 = vxpose.xlu0.c.b16.start [1/8] %v238, 128
          %243 = vxpose.xlu0.c.b16.cont [2/8] 0, 128
          %244 = vxpose.xlu0.c.b16.cont [3/8] 0, 128
          %245 = vxpose.xlu0.c.b16.cont [4/8] 0, 128
          %246 = vxpose.xlu0.c.b16.cont [5/8] 0, 128
          %247 = vxpose.xlu0.c.b16.cont [6/8] 0, 128
          %248 = vxpose.xlu0.c.b16.cont [7/8] 0, 128
          %249 = vxpose.xlu0.c.b16.end [8/8] 0, 128
          %v250 = vpop.trf.xlu0
          %v251 = vpop.trf.xlu0
          %v252 = vpop.trf.xlu0
          %v253 = vpop.trf.xlu0
          %v254 = vpop.trf.xlu0
          %v255 = vpop.trf.xlu0
          %v256 = vpop.trf.xlu0
          %v257 = vpop.trf.xlu0
          %258 = vxpose.xlu0.c.b16.start [1/8] %v239, 128
          %259 = vxpose.xlu0.c.b16.cont [2/8] 0, 128
          %260 = vxpose.xlu0.c.b16.cont [3/8] 0, 128
          %261 = vxpose.xlu0.c.b16.cont [4/8] 0, 128
          %262 = vxpose.xlu0.c.b16.cont [5/8] 0, 128
          %263 = vxpose.xlu0.c.b16.cont [6/8] 0, 128
          %264 = vxpose.xlu0.c.b16.cont [7/8] 0, 128
          %265 = vxpose.xlu0.c.b16.end [8/8] 0, 128
          %v266 = vpop.trf.xlu0
          %v267 = vpop.trf.xlu0
          %v268 = vpop.trf.xlu0
          %v269 = vpop.trf.xlu0
          %v270 = vpop.trf.xlu0
          %v271 = vpop.trf.xlu0
          %v272 = vpop.trf.xlu0
          %v273 = vpop.trf.xlu0
          %vm274 = vcmask 64512
          %v276 = vsel %vm274, %v250, 0
          %v279 = vsel %vm274, %v251, 0
          %v282 = vsel %vm274, %v252, 0
          %v285 = vsel %vm274, %v253, 0
          %v288 = vsel %vm274, %v254, 0
          %v291 = vsel %vm274, %v255, 0
          %v294 = vsel %vm274, %v256, 0
          %v297 = vsel %vm274, %v257, 0
          %v300 = vsel %vm274, %v266, 0
          %v303 = vsel %vm274, %v267, 0
          %v306 = vsel %vm274, %v268, 0
          %v309 = vsel %vm274, %v269, 0
          %v312 = vsel %vm274, %v270, 0
          %v315 = vsel %vm274, %v271, 0
          %v318 = vsel %vm274, %v272, 0
          %v321 = vsel %vm274, %v273, 0
          %vm323 = vcmask 1043456
          %v325 = vsel %vm323, %v233, 0
          %327 = vmatprep.subr.bf16.mxu0 0
          %328 = vmatpush1.bf16.msra.mxu0 %v325
          %329 = vmatprep.subr.bf16.mxu0 0
          %330 = vmatpush1.bf16.msra.mxu0 0
          %331 = vmatprep.subr.bf16.mxu0 0
          %332 = vmatpush1.bf16.msra.mxu0 0
          %333 = vmatprep.subr.bf16.mxu0 0
          %334 = vmatpush1.bf16.msra.mxu0 0
          %335 = vmatprep.subr.bf16.mxu0 0
          %336 = vmatpush1.bf16.msra.mxu0 0
          %337 = vmatprep.subr.bf16.mxu0 0
          %338 = vmatpush1.bf16.msra.mxu0 0
          %339 = vmatprep.subr.bf16.mxu0 0
          %340 = vmatpush1.bf16.msra.mxu0 0
          %341 = vmatprep.subr.bf16.mxu0 0
          %342 = vmatpush1.bf16.msra.mxu0 0
          %343 = vmatprep.subr.bf16.mxu0 0
          %344 = vmatpush1.bf16.msra.mxu0 0
          %345 = vmatprep.subr.bf16.mxu0 0
          %346 = vmatpush1.bf16.msra.mxu0 0
          %347 = vmatprep.subr.bf16.mxu0 0
          %348 = vmatpush1.bf16.msra.mxu0 0
          %349 = vmatprep.subr.bf16.mxu0 0
          %350 = vmatpush1.bf16.msra.mxu0 0
          %351 = vmatprep.subr.bf16.mxu0 0
          %352 = vmatpush1.bf16.msra.mxu0 0
          %353 = vmatprep.subr.bf16.mxu0 0
          %354 = vmatpush1.bf16.msra.mxu0 0
          %355 = vmatprep.subr.bf16.mxu0 0
          %356 = vmatpush1.bf16.msra.mxu0 0
          %357 = vmatprep.subr.bf16.mxu0 0
          %358 = vmatpush1.bf16.msra.mxu0 0
          %359 = vmatprep.mubr.bf16.mxu0 0
          %360 = vmatmul.mubr.bf16.gmra.mrb[0].mxu0 %v276
          %v361 = vpop.f32.mrb[0].mxu0
          %v362 = vadd.f32 0.0, %v361
          %v363 = vpop.f32.mrb[0].mxu0
          %v364 = vpop.f32.mrb[0].mxu0
          %v365 = vadd.f32 0.0, %v364
          %v366 = vpop.f32.mrb[0].mxu0
          %367 = vmatprep.mubr.bf16.mxu0 0
          %368 = vmatmul.mubr.bf16.gmra.mrb[0].mxu0 %v279
          %v369 = vpop.f32.mrb[0].mxu0
          %v370 = vadd.f32 0.0, %v369
          %v371 = vpop.f32.mrb[0].mxu0
          %v372 = vpop.f32.mrb[0].mxu0
          %v373 = vadd.f32 0.0, %v372
          %v374 = vpop.f32.mrb[0].mxu0
          %375 = vmatprep.mubr.bf16.mxu0 0
          %376 = vmatmul.mubr.bf16.gmra.mrb[0].mxu0 %v282
          %v377 = vpop.f32.mrb[0].mxu0
          %v378 = vadd.f32 0.0, %v377
          %v379 = vpop.f32.mrb[0].mxu0
          %v380 = vpop.f32.mrb[0].mxu0
          %v381 = vadd.f32 0.0, %v380
          %v382 = vpop.f32.mrb[0].mxu0
          %383 = vmatprep.mubr.bf16.mxu0 0
          %384 = vmatmul.mubr.bf16.gmra.mrb[0].mxu0 %v285
          %v385 = vpop.f32.mrb[0].mxu0
          %v386 = vadd.f32 0.0, %v385
          %v387 = vpop.f32.mrb[0].mxu0
          %v388 = vpop.f32.mrb[0].mxu0
          %v389 = vadd.f32 0.0, %v388
          %v390 = vpop.f32.mrb[0].mxu0
          %391 = vmatprep.mubr.bf16.mxu0 0
          %392 = vmatmul.mubr.bf16.gmra.mrb[0].mxu0 %v288
          %v393 = vpop.f32.mrb[0].mxu0
          %v394 = vadd.f32 0.0, %v393
          %v395 = vpop.f32.mrb[0].mxu0
          %v396 = vpop.f32.mrb[0].mxu0
          %v397 = vadd.f32 0.0, %v396
          %v398 = vpop.f32.mrb[0].mxu0
          %399 = vmatprep.mubr.bf16.mxu0 0
          %400 = vmatmul.mubr.bf16.gmra.mrb[0].mxu0 %v291
          %v401 = vpop.f32.mrb[0].mxu0
          %v402 = vadd.f32 0.0, %v401
          %v403 = vpop.f32.mrb[0].mxu0
          %v404 = vpop.f32.mrb[0].mxu0
          %v405 = vadd.f32 0.0, %v404
          %v406 = vpop.f32.mrb[0].mxu0
          %407 = vmatprep.mubr.bf16.mxu0 0
          %408 = vmatmul.mubr.bf16.gmra.mrb[0].mxu0 %v294
          %v409 = vpop.f32.mrb[0].mxu0
          %v410 = vadd.f32 0.0, %v409
          %v411 = vpop.f32.mrb[0].mxu0
          %v412 = vpop.f32.mrb[0].mxu0
          %v413 = vadd.f32 0.0, %v412
          %v414 = vpop.f32.mrb[0].mxu0
          %415 = vmatprep.mubr.bf16.mxu0 0
          %416 = vmatmul.mubr.bf16.gmra.mrb[0].mxu0 %v297
          %v417 = vpop.f32.mrb[0].mxu0
          %v418 = vadd.f32 0.0, %v417
          %v419 = vpop.f32.mrb[0].mxu0
          %v420 = vpop.f32.mrb[0].mxu0
          %v421 = vadd.f32 0.0, %v420
          %v422 = vpop.f32.mrb[0].mxu0
          %423 = vmatprep.mubr.bf16.mxu0 0
          %424 = vmatmul.mubr.bf16.gmra.mrb[0].mxu0 %v300
          %v425 = vpop.f32.mrb[0].mxu0
          %v426 = vadd.f32 0.0, %v425
          %v427 = vpop.f32.mrb[0].mxu0
          %v428 = vpop.f32.mrb[0].mxu0
          %v429 = vadd.f32 0.0, %v428
          %v430 = vpop.f32.mrb[0].mxu0
          %431 = vmatprep.mubr.bf16.mxu0 0
          %432 = vmatmul.mubr.bf16.gmra.mrb[0].mxu0 %v303
          %v433 = vpop.f32.mrb[0].mxu0
          %v434 = vadd.f32 0.0, %v433
          %v435 = vpop.f32.mrb[0].mxu0
          %v436 = vpop.f32.mrb[0].mxu0
          %v437 = vadd.f32 0.0, %v436
          %v438 = vpop.f32.mrb[0].mxu0
          %439 = vmatprep.mubr.bf16.mxu0 0
          %440 = vmatmul.mubr.bf16.gmra.mrb[0].mxu0 %v306
          %v441 = vpop.f32.mrb[0].mxu0
          %v442 = vadd.f32 0.0, %v441
          %v443 = vpop.f32.mrb[0].mxu0
          %v444 = vpop.f32.mrb[0].mxu0
          %v445 = vadd.f32 0.0, %v444
          %v446 = vpop.f32.mrb[0].mxu0
          %447 = vmatprep.mubr.bf16.mxu0 0
          %448 = vmatmul.mubr.bf16.gmra.mrb[0].mxu0 %v309
          %v449 = vpop.f32.mrb[0].mxu0
          %v450 = vadd.f32 0.0, %v449
          %v451 = vpop.f32.mrb[0].mxu0
          %v452 = vpop.f32.mrb[0].mxu0
          %v453 = vadd.f32 0.0, %v452
          %v454 = vpop.f32.mrb[0].mxu0
          %455 = vmatprep.mubr.bf16.mxu0 0
          %456 = vmatmul.mubr.bf16.gmra.mrb[0].mxu0 %v312
          %v457 = vpop.f32.mrb[0].mxu0
          %v458 = vadd.f32 0.0, %v457
          %v459 = vpop.f32.mrb[0].mxu0
          %v460 = vpop.f32.mrb[0].mxu0
          %v461 = vadd.f32 0.0, %v460
          %v462 = vpop.f32.mrb[0].mxu0
          %463 = vmatprep.mubr.bf16.mxu0 0
          %464 = vmatmul.mubr.bf16.gmra.mrb[0].mxu0 %v315
          %v465 = vpop.f32.mrb[0].mxu0
          %v466 = vadd.f32 0.0, %v465
          %v467 = vpop.f32.mrb[0].mxu0
          %v468 = vpop.f32.mrb[0].mxu0
          %v469 = vadd.f32 0.0, %v468
          %v470 = vpop.f32.mrb[0].mxu0
          %471 = vmatprep.mubr.bf16.mxu0 0
          %472 = vmatmul.mubr.bf16.gmra.mrb[0].mxu0 %v318
          %v473 = vpop.f32.mrb[0].mxu0
          %v474 = vadd.f32 0.0, %v473
          %v475 = vpop.f32.mrb[0].mxu0
          %v476 = vpop.f32.mrb[0].mxu0
          %v477 = vadd.f32 0.0, %v476
          %v478 = vpop.f32.mrb[0].mxu0
          %479 = vmatprep.mubr.bf16.mxu0 0
          %480 = vmatmul.mubr.bf16.gmra.mrb[0].mxu0 %v321
          %v481 = vpop.f32.mrb[0].mxu0
          %v482 = vadd.f32 0.0, %v481
          %v483 = vpop.f32.mrb[0].mxu0
          %v484 = vpop.f32.mrb[0].mxu0
          %v485 = vadd.f32 0.0, %v484
          %v486 = vpop.f32.mrb[0].mxu0
          %487 = vdwg.mxu0
          %v488 = vpack.c.bf16 %v365, %v362
          %v489 = vpack.c.bf16 %v373, %v370
          %v490 = vpack.c.bf16 %v381, %v378
          %v491 = vpack.c.bf16 %v389, %v386
          %v492 = vpack.c.bf16 %v397, %v394
          %v493 = vpack.c.bf16 %v405, %v402
          %v494 = vpack.c.bf16 %v413, %v410
          %v495 = vpack.c.bf16 %v421, %v418
          %v496 = vpack.c.bf16 %v429, %v426
          %v497 = vpack.c.bf16 %v437, %v434
          %v498 = vpack.c.bf16 %v445, %v442
          %v499 = vpack.c.bf16 %v453, %v450
          %v500 = vpack.c.bf16 %v461, %v458
          %v501 = vpack.c.bf16 %v469, %v466
          %v502 = vpack.c.bf16 %v477, %v474
          %v503 = vpack.c.bf16 %v485, %v482
          %504 = vst [vmem:[#allocation2] sm:$0xff] %v488
          %505 = vst [vmem:[#allocation2 + $0x8] sm:$0xff] %v489
          %506 = vst [vmem:[#allocation2 + $0x10] sm:$0xff] %v490
          %507 = vst [vmem:[#allocation2 + $0x18] sm:$0xff] %v491
          %508 = vst [vmem:[#allocation2 + $0x20] sm:$0xff] %v492
          %509 = vst [vmem:[#allocation2 + $0x28] sm:$0xff] %v493
          %510 = vst [vmem:[#allocation2 + $0x30] sm:$0xff] %v494
          %511 = vst [vmem:[#allocation2 + $0x38] sm:$0xff] %v495
          %512 = vst [vmem:[#allocation2 + $0x40] sm:$0xff] %v496
          %513 = vst [vmem:[#allocation2 + $0x48] sm:$0xff] %v497
          %514 = vst [vmem:[#allocation2 + $0x50] sm:$0xff] %v498
          %515 = vst [vmem:[#allocation2 + $0x58] sm:$0xff] %v499
          %516 = vst [vmem:[#allocation2 + $0x60] sm:$0xff] %v500
          %517 = vst [vmem:[#allocation2 + $0x68] sm:$0xff] %v501
          %518 = vst [vmem:[#allocation2 + $0x70] sm:$0xff] %v502
          %519 = vst [vmem:[#allocation2 + $0x78] sm:$0xff] %v503
        $region44: #{tpu_custom_call.1} parent=35 // pred_fallthru
          _
        %s520 = smul.u32 %s26, 128
        %s521 = sshra.s32 %s520, 7
        %s522 = sand.u32 %s520, 127
        %s523 = scalar_lea.vmem %s202, %s521 [#allocation5]
        %v524 = vld [vmem:[%s523] sm:$0xff]
        %v525 = vpack.c.bf16 %v524, %v524
        %v526 = vld [vmem:[%s1] sm:$0xf]
        %527 = vxpose.xlu0.c.b16.start [1/8] %v526, 128
        %528 = vxpose.xlu0.c.b16.cont [2/8] 0, 128
        %529 = vxpose.xlu0.c.b16.cont [3/8] 0, 128
        %530 = vxpose.xlu0.c.b16.cont [4/8] 0, 128
        %531 = vxpose.xlu0.c.b16.cont [5/8] 0, 128
        %532 = vxpose.xlu0.c.b16.cont [6/8] 0, 128
        %533 = vxpose.xlu0.c.b16.cont [7/8] 0, 128
        %534 = vxpose.xlu0.c.b16.end [8/8] 0, 128
        %v535 = vpop.trf.xlu0
        %v536 = vpop.trf.xlu0
        %v537 = vpop.trf.xlu0
        %v538 = vpop.trf.xlu0
        %v539 = vpop.trf.xlu0
        %v540 = vpop.trf.xlu0
        %v541 = vpop.trf.xlu0
        %v542 = vpop.trf.xlu0
        %vm543 = vcmask 64512
        %v545 = vsel %vm543, %v535, 0
        %v548 = vsel %vm543, %v536, 0
        %v551 = vsel %vm543, %v537, 0
        %v554 = vsel %vm543, %v538, 0
        %v557 = vsel %vm543, %v539, 0
        %v560 = vsel %vm543, %v540, 0
        %v563 = vsel %vm543, %v541, 0
        %v566 = vsel %vm543, %v542, 0
        %vm568 = vcmask 1043456
        %v570 = vsel %vm568, %v525, 0
        %572 = vmatprep.subr.bf16.mxu0 0
        %573 = vmatpush1.bf16.msra.mxu0 %v570
        %574 = vmatprep.subr.bf16.mxu0 0
        %575 = vmatpush1.bf16.msra.mxu0 0
        %576 = vmatprep.subr.bf16.mxu0 0
        %577 = vmatpush1.bf16.msra.mxu0 0
        %578 = vmatprep.subr.bf16.mxu0 0
        %579 = vmatpush1.bf16.msra.mxu0 0
        %580 = vmatprep.subr.bf16.mxu0 0
        %581 = vmatpush1.bf16.msra.mxu0 0
        %582 = vmatprep.subr.bf16.mxu0 0
        %583 = vmatpush1.bf16.msra.mxu0 0
        %584 = vmatprep.subr.bf16.mxu0 0
        %585 = vmatpush1.bf16.msra.mxu0 0
        %586 = vmatprep.subr.bf16.mxu0 0
        %587 = vmatpush1.bf16.msra.mxu0 0
        %588 = vmatprep.subr.bf16.mxu0 0
        %589 = vmatpush1.bf16.msra.mxu0 0
        %590 = vmatprep.subr.bf16.mxu0 0
        %591 = vmatpush1.bf16.msra.mxu0 0
        %592 = vmatprep.subr.bf16.mxu0 0
        %593 = vmatpush1.bf16.msra.mxu0 0
        %594 = vmatprep.subr.bf16.mxu0 0
        %595 = vmatpush1.bf16.msra.mxu0 0
        %596 = vmatprep.subr.bf16.mxu0 0
        %597 = vmatpush1.bf16.msra.mxu0 0
        %598 = vmatprep.subr.bf16.mxu0 0
        %599 = vmatpush1.bf16.msra.mxu0 0
        %600 = vmatprep.subr.bf16.mxu0 0
        %601 = vmatpush1.bf16.msra.mxu0 0
        %602 = vmatprep.subr.bf16.mxu0 0
        %603 = vmatpush1.bf16.msra.mxu0 0
        %604 = vmatprep.mubr.bf16.mxu0 0
        %605 = vmatmul.mubr.bf16.gmra.mrb[0].mxu0 %v545
        %v606 = vpop.f32.mrb[0].mxu0
        %v607 = vadd.f32 0.0, %v606
        %v608 = vpop.f32.mrb[0].mxu0
        %v609 = vpop.f32.mrb[0].mxu0
        %v610 = vadd.f32 0.0, %v609
        %v611 = vpop.f32.mrb[0].mxu0
        %612 = vmatprep.mubr.bf16.mxu0 0
        %613 = vmatmul.mubr.bf16.gmra.mrb[0].mxu0 %v548
        %v614 = vpop.f32.mrb[0].mxu0
        %v615 = vadd.f32 0.0, %v614
        %v616 = vpop.f32.mrb[0].mxu0
        %v617 = vpop.f32.mrb[0].mxu0
        %v618 = vadd.f32 0.0, %v617
        %v619 = vpop.f32.mrb[0].mxu0
        %620 = vmatprep.mubr.bf16.mxu0 0
        %621 = vmatmul.mubr.bf16.gmra.mrb[0].mxu0 %v551
        %v622 = vpop.f32.mrb[0].mxu0
        %v623 = vadd.f32 0.0, %v622
        %v624 = vpop.f32.mrb[0].mxu0
        %v625 = vpop.f32.mrb[0].mxu0
        %v626 = vadd.f32 0.0, %v625
        %v627 = vpop.f32.mrb[0].mxu0
        %628 = vmatprep.mubr.bf16.mxu0 0
        %629 = vmatmul.mubr.bf16.gmra.mrb[0].mxu0 %v554
        %v630 = vpop.f32.mrb[0].mxu0
        %v631 = vadd.f32 0.0, %v630
        %v632 = vpop.f32.mrb[0].mxu0
        %v633 = vpop.f32.mrb[0].mxu0
        %v634 = vadd.f32 0.0, %v633
        %v635 = vpop.f32.mrb[0].mxu0
        %636 = vmatprep.mubr.bf16.mxu0 0
        %637 = vmatmul.mubr.bf16.gmra.mrb[0].mxu0 %v557
        %v638 = vpop.f32.mrb[0].mxu0
        %v639 = vadd.f32 0.0, %v638
        %v640 = vpop.f32.mrb[0].mxu0
        %v641 = vpop.f32.mrb[0].mxu0
        %v642 = vadd.f32 0.0, %v641
        %v643 = vpop.f32.mrb[0].mxu0
        %644 = vmatprep.mubr.bf16.mxu0 0
        %645 = vmatmul.mubr.bf16.gmra.mrb[0].mxu0 %v560
        %v646 = vpop.f32.mrb[0].mxu0
        %v647 = vadd.f32 0.0, %v646
        %v648 = vpop.f32.mrb[0].mxu0
        %v649 = vpop.f32.mrb[0].mxu0
        %v650 = vadd.f32 0.0, %v649
        %v651 = vpop.f32.mrb[0].mxu0
        %652 = vmatprep.mubr.bf16.mxu0 0
        %653 = vmatmul.mubr.bf16.gmra.mrb[0].mxu0 %v563
        %v654 = vpop.f32.mrb[0].mxu0
        %v655 = vadd.f32 0.0, %v654
        %v656 = vpop.f32.mrb[0].mxu0
        %v657 = vpop.f32.mrb[0].mxu0
        %v658 = vadd.f32 0.0, %v657
        %v659 = vpop.f32.mrb[0].mxu0
        %660 = vmatprep.mubr.bf16.mxu0 0
        %661 = vmatmul.mubr.bf16.gmra.mrb[0].mxu0 %v566
        %v662 = vpop.f32.mrb[0].mxu0
        %v663 = vadd.f32 0.0, %v662
        %v664 = vpop.f32.mrb[0].mxu0
        %v665 = vpop.f32.mrb[0].mxu0
        %v666 = vadd.f32 0.0, %v665
        %v667 = vpop.f32.mrb[0].mxu0
        %668 = vdwg.mxu0
        %v669 = vpack.c.bf16 %v610, %v607
        %v670 = vpack.c.bf16 %v618, %v615
        %v671 = vpack.c.bf16 %v626, %v623
        %v672 = vpack.c.bf16 %v634, %v631
        %v673 = vpack.c.bf16 %v642, %v639
        %v674 = vpack.c.bf16 %v650, %v647
        %v675 = vpack.c.bf16 %v658, %v655
        %v676 = vpack.c.bf16 %v666, %v663
        %677 = vst [vmem:[#allocation3] sm:$0xff] %v669
        %678 = vst [vmem:[#allocation3 + $0x8] sm:$0xff] %v670
        %679 = vst [vmem:[#allocation3 + $0x10] sm:$0xff] %v671
        %680 = vst [vmem:[#allocation3 + $0x18] sm:$0xff] %v672
        %681 = vst [vmem:[#allocation3 + $0x20] sm:$0xff] %v673
        %682 = vst [vmem:[#allocation3 + $0x28] sm:$0xff] %v674
        %683 = vst [vmem:[#allocation3 + $0x30] sm:$0xff] %v675
        %684 = vst [vmem:[#allocation3 + $0x38] sm:$0xff] %v676
        %v685 = vlaneseq
        %v686 = vshrl.u32 %v685, 7
        %v687 = vadd.s32 %v686, 8
        %v688 = vadd.s32 %v686, 16
        %v689 = vadd.s32 %v686, 24
        %v690 = vadd.s32 %v686, 32
        %v691 = vadd.s32 %v686, 40
        %v692 = vadd.s32 %v686, 48
        %v693 = vadd.s32 %v686, 56
        %v694 = vadd.s32 %v686, 64
        %v695 = vadd.s32 %v686, 72
        %v696 = vadd.s32 %v686, 80
        %v697 = vadd.s32 %v686, 88
        %v698 = vadd.s32 %v686, 96
        %v699 = vadd.s32 %v686, 104
        %v700 = vadd.s32 %v686, 112
        %v701 = vadd.s32 %v686, 120
        %vm702 = vcmp.lt.s32.totalorder %v686, 64
        %vm703 = vcmp.lt.s32.totalorder %v687, 64
        %vm704 = vcmp.lt.s32.totalorder %v688, 64
        %vm705 = vcmp.lt.s32.totalorder %v689, 64
        %vm706 = vcmp.lt.s32.totalorder %v690, 64
        %vm707 = vcmp.lt.s32.totalorder %v691, 64
        %vm708 = vcmp.lt.s32.totalorder %v692, 64
        %vm709 = vcmp.lt.s32.totalorder %v693, 64
        %vm710 = vcmp.lt.s32.totalorder %v694, 64
        %vm711 = vcmp.lt.s32.totalorder %v695, 64
        %vm712 = vcmp.lt.s32.totalorder %v696, 64
        %vm713 = vcmp.lt.s32.totalorder %v697, 64
        %vm714 = vcmp.lt.s32.totalorder %v698, 64
        %vm715 = vcmp.lt.s32.totalorder %v699, 64
        %vm716 = vcmp.lt.s32.totalorder %v700, 64
        %vm717 = vcmp.lt.s32.totalorder %v701, 64
        loop: start=0, step=1, limit=4
        $region45: #{tpu_custom_call.1} parent=35 // loop_pre_header
          _
        $region46: #{tpu_custom_call.1} parent=35 // loop_header
          %s719 = sphi 0, %s723
          %p720 = scmp.ge.s32.totalorder %s719, 4
        $region47: #{tpu_custom_call.1} parent=35 // loop_header_branch
          %722 = sbr.rel (%p720) target = $region51
        $region48: #{tpu_custom_call.1} parent=35 // loop_body
          %s724 = smul.u32 %s719, 32
          %s725 = sshra.s32 %s724, 4
          %s726 = sand.u32 %s724, 15
          %s727 = smul.addr %s725, 8
          %s728 = scalar_lea.vmem [#allocation3], %s727
          %v729 = vld [vmem:[%s728] sm:$0xff]
          %v730 = vld [vmem:[%s728 + $0x8] sm:$0xff]
          %s731 = smul.addr %s725, 8
          %s732 = scalar_lea.vmem [#allocation2], %s731
          %v733 = vld [vmem:[%s732] sm:$0xff]
          %v734 = vld [vmem:[%s732 + $0x8] sm:$0xff]
          %s735 = sadd.s32 %s724, 128
          %s736 = sshra.s32 %s735, 4
          %s737 = sand.u32 %s735, 15
          %s738 = smul.addr %s736, 8
          %s739 = scalar_lea.vmem [#allocation2], %s738
          %v740 = vld [vmem:[%s739] sm:$0xff]
          %v741 = vld [vmem:[%s739 + $0x8] sm:$0xff]
          %742 = vxpose.xlu0.c.b16.start [1/8] %v733, 128
          %743 = vxpose.xlu0.c.b16.cont [2/8] %v734, 128
          %744 = vxpose.xlu0.c.b16.cont [3/8] 0, 128
          %745 = vxpose.xlu0.c.b16.cont [4/8] 0, 128
          %746 = vxpose.xlu0.c.b16.cont [5/8] 0, 128
          %747 = vxpose.xlu0.c.b16.cont [6/8] 0, 128
          %748 = vxpose.xlu0.c.b16.cont [7/8] 0, 128
          %749 = vxpose.xlu0.c.b16.end [8/8] 0, 128
          %v750 = vpop.trf.xlu0
          %v751 = vpop.trf.xlu0
          %v752 = vpop.trf.xlu0
          %v753 = vpop.trf.xlu0
          %v754 = vpop.trf.xlu0
          %v755 = vpop.trf.xlu0
          %v756 = vpop.trf.xlu0
          %v757 = vpop.trf.xlu0
          %vm758 = vcmask 261120
          %v760 = vsel %vm758, %v750, 0
          %v763 = vsel %vm758, %v751, 0
          %v766 = vsel %vm758, %v752, 0
          %v769 = vsel %vm758, %v753, 0
          %v772 = vsel %vm758, %v754, 0
          %v775 = vsel %vm758, %v755, 0
          %v778 = vsel %vm758, %v756, 0
          %v781 = vsel %vm758, %v757, 0
          %783 = vmatprep.subr.bf16.mxu0 0
          %784 = vmatpush1.bf16.msra.mxu0 %v729
          %785 = vmatprep.subr.bf16.mxu0 0
          %786 = vmatpush1.bf16.msra.mxu0 %v730
          %787 = vmatprep.subr.bf16.mxu0 0
          %788 = vmatpush1.bf16.msra.mxu0 0
          %789 = vmatprep.subr.bf16.mxu0 0
          %790 = vmatpush1.bf16.msra.mxu0 0
          %791 = vmatprep.subr.bf16.mxu0 0
          %792 = vmatpush1.bf16.msra.mxu0 0
          %793 = vmatprep.subr.bf16.mxu0 0
          %794 = vmatpush1.bf16.msra.mxu0 0
          %795 = vmatprep.subr.bf16.mxu0 0
          %796 = vmatpush1.bf16.msra.mxu0 0
          %797 = vmatprep.subr.bf16.mxu0 0
          %798 = vmatpush1.bf16.msra.mxu0 0
          %799 = vmatprep.subr.bf16.mxu0 0
          %800 = vmatpush1.bf16.msra.mxu0 0
          %801 = vmatprep.subr.bf16.mxu0 0
          %802 = vmatpush1.bf16.msra.mxu0 0
          %803 = vmatprep.subr.bf16.mxu0 0
          %804 = vmatpush1.bf16.msra.mxu0 0
          %805 = vmatprep.subr.bf16.mxu0 0
          %806 = vmatpush1.bf16.msra.mxu0 0
          %807 = vmatprep.subr.bf16.mxu0 0
          %808 = vmatpush1.bf16.msra.mxu0 0
          %809 = vmatprep.subr.bf16.mxu0 0
          %810 = vmatpush1.bf16.msra.mxu0 0
          %811 = vmatprep.subr.bf16.mxu0 0
          %812 = vmatpush1.bf16.msra.mxu0 0
          %813 = vmatprep.subr.bf16.mxu0 0
          %814 = vmatpush1.bf16.msra.mxu0 0
          %815 = vmatprep.mubr.bf16.mxu0 0
          %816 = vmatmul.mubr.bf16.gmra.mrb[0].mxu0 %v760
          %v817 = vpop.f32.mrb[0].mxu0
          %v818 = vadd.f32 0.0, %v817
          %v819 = vpop.f32.mrb[0].mxu0
          %v820 = vpop.f32.mrb[0].mxu0
          %v821 = vadd.f32 0.0, %v820
          %v822 = vpop.f32.mrb[0].mxu0
          %823 = vmatprep.mubr.bf16.mxu0 0
          %824 = vmatmul.mubr.bf16.gmra.mrb[0].mxu0 %v763
          %v825 = vpop.f32.mrb[0].mxu0
          %v826 = vadd.f32 0.0, %v825
          %v827 = vpop.f32.mrb[0].mxu0
          %v828 = vpop.f32.mrb[0].mxu0
          %v829 = vadd.f32 0.0, %v828
          %v830 = vpop.f32.mrb[0].mxu0
          %831 = vmatprep.mubr.bf16.mxu0 0
          %832 = vmatmul.mubr.bf16.gmra.mrb[0].mxu0 %v766
          %v833 = vpop.f32.mrb[0].mxu0
          %v834 = vadd.f32 0.0, %v833
          %v835 = vpop.f32.mrb[0].mxu0
          %v836 = vpop.f32.mrb[0].mxu0
          %v837 = vadd.f32 0.0, %v836
          %v838 = vpop.f32.mrb[0].mxu0
          %839 = vmatprep.mubr.bf16.mxu0 0
          %840 = vmatmul.mubr.bf16.gmra.mrb[0].mxu0 %v769
          %v841 = vpop.f32.mrb[0].mxu0
          %v842 = vadd.f32 0.0, %v841
          %v843 = vpop.f32.mrb[0].mxu0
          %v844 = vpop.f32.mrb[0].mxu0
          %v845 = vadd.f32 0.0, %v844
          %v846 = vpop.f32.mrb[0].mxu0
          %847 = vmatprep.mubr.bf16.mxu0 0
          %848 = vmatmul.mubr.bf16.gmra.mrb[0].mxu0 %v772
          %v849 = vpop.f32.mrb[0].mxu0
          %v850 = vadd.f32 0.0, %v849
          %v851 = vpop.f32.mrb[0].mxu0
          %v852 = vpop.f32.mrb[0].mxu0
          %v853 = vadd.f32 0.0, %v852
          %v854 = vpop.f32.mrb[0].mxu0
          %855 = vmatprep.mubr.bf16.mxu0 0
          %856 = vmatmul.mubr.bf16.gmra.mrb[0].mxu0 %v775
          %v857 = vpop.f32.mrb[0].mxu0
          %v858 = vadd.f32 0.0, %v857
          %v859 = vpop.f32.mrb[0].mxu0
          %v860 = vpop.f32.mrb[0].mxu0
          %v861 = vadd.f32 0.0, %v860
          %v862 = vpop.f32.mrb[0].mxu0
          %863 = vmatprep.mubr.bf16.mxu0 0
          %864 = vmatmul.mubr.bf16.gmra.mrb[0].mxu0 %v778
          %v865 = vpop.f32.mrb[0].mxu0
          %v866 = vadd.f32 0.0, %v865
          %v867 = vpop.f32.mrb[0].mxu0
          %v868 = vpop.f32.mrb[0].mxu0
          %v869 = vadd.f32 0.0, %v868
          %v870 = vpop.f32.mrb[0].mxu0
          %871 = vmatprep.mubr.bf16.mxu0 0
          %872 = vmatmul.mubr.bf16.gmra.mrb[0].mxu0 %v781
          %v873 = vpop.f32.mrb[0].mxu0
          %v874 = vadd.f32 0.0, %v873
          %v875 = vpop.f32.mrb[0].mxu0
          %v876 = vpop.f32.mrb[0].mxu0
          %v877 = vadd.f32 0.0, %v876
          %v878 = vpop.f32.mrb[0].mxu0
          %879 = vdwg.mxu0
          %v880 = vsel %vm702, 1, 0
          %v881 = vsel %vm703, 1, 0
          %v882 = vsel %vm704, 1, 0
          %v883 = vsel %vm705, 1, 0
          %v884 = vsel %vm706, 1, 0
          %v885 = vsel %vm707, 1, 0
          %v886 = vsel %vm708, 1, 0
          %v887 = vsel %vm709, 1, 0
          %v888 = vsel %vm710, 1, 0
          %v889 = vsel %vm711, 1, 0
          %v890 = vsel %vm712, 1, 0
          %v891 = vsel %vm713, 1, 0
          %v892 = vsel %vm714, 1, 0
          %v893 = vsel %vm715, 1, 0
          %v894 = vsel %vm716, 1, 0
          %v895 = vsel %vm717, 1, 0
          %vm896 = vcmp.eq.s32.totalorder %v880, 1
          %vm897 = vcmp.eq.s32.totalorder %v881, 1
          %vm898 = vcmp.eq.s32.totalorder %v882, 1
          %vm899 = vcmp.eq.s32.totalorder %v883, 1
          %vm900 = vcmp.eq.s32.totalorder %v884, 1
          %vm901 = vcmp.eq.s32.totalorder %v885, 1
          %vm902 = vcmp.eq.s32.totalorder %v886, 1
          %vm903 = vcmp.eq.s32.totalorder %v887, 1
          %vm904 = vcmp.eq.s32.totalorder %v888, 1
          %vm905 = vcmp.eq.s32.totalorder %v889, 1
          %vm906 = vcmp.eq.s32.totalorder %v890, 1
          %vm907 = vcmp.eq.s32.totalorder %v891, 1
          %vm908 = vcmp.eq.s32.totalorder %v892, 1
          %vm909 = vcmp.eq.s32.totalorder %v893, 1
          %vm910 = vcmp.eq.s32.totalorder %v894, 1
          %vm911 = vcmp.eq.s32.totalorder %v895, 1
          %v912 = vsel %vm896, %v818, -1e+30
          %v913 = vsel %vm897, %v821, -1e+30
          %v914 = vsel %vm898, %v826, -1e+30
          %v915 = vsel %vm899, %v829, -1e+30
          %v916 = vsel %vm900, %v834, -1e+30
          %v917 = vsel %vm901, %v837, -1e+30
          %v918 = vsel %vm902, %v842, -1e+30
          %v919 = vsel %vm903, %v845, -1e+30
          %v920 = vsel %vm904, %v850, -1e+30
          %v921 = vsel %vm905, %v853, -1e+30
          %v922 = vsel %vm906, %v858, -1e+30
          %v923 = vsel %vm907, %v861, -1e+30
          %v924 = vsel %vm908, %v866, -1e+30
          %v925 = vsel %vm909, %v869, -1e+30
          %v926 = vsel %vm910, %v874, -1e+30
          %v927 = vsel %vm911, %v877, -1e+30
          %v928 = vmax.f32 %v912, %v916
          %v929 = vmax.f32 %v913, %v917
          %v930 = vmax.f32 %v914, %v918
          %v931 = vmax.f32 %v915, %v919
          %v932 = vmax.f32 %v928, %v920
          %v933 = vmax.f32 %v929, %v921
          %v934 = vmax.f32 %v930, %v922
          %v935 = vmax.f32 %v931, %v923
          %v936 = vmax.f32 %v932, %v924
          %v937 = vmax.f32 %v933, %v925
          %v938 = vmax.f32 %v934, %v926
          %v939 = vmax.f32 %v935, %v927
          %v940 = vmax.f32 %v936, %v937
          %v941 = vmax.f32 %v938, %v939
          %v942 = vmax.f32 %v940, %v941
          %v943 = vrot.slane %v942, 4
          %v944 = vmax.f32 %v942, %v943
          %v945 = vrot.slane %v944, 2
          %v946 = vmax.f32 %v944, %v945
          %v947 = vrot.slane %v946, 1
          %v948 = vmax.f32 %v946, %v947
          %v949 = vsub.f32 %v912, %v948
          %v950 = vsub.f32 %v913, %v948
          %v951 = vsub.f32 %v914, %v948
          %v952 = vsub.f32 %v915, %v948
          %v953 = vsub.f32 %v916, %v948
          %v954 = vsub.f32 %v917, %v948
          %v955 = vsub.f32 %v918, %v948
          %v956 = vsub.f32 %v919, %v948
          %v957 = vsub.f32 %v920, %v948
          %v958 = vsub.f32 %v921, %v948
          %v959 = vsub.f32 %v922, %v948
          %v960 = vsub.f32 %v923, %v948
          %v961 = vsub.f32 %v924, %v948
          %v962 = vsub.f32 %v925, %v948
          %v963 = vsub.f32 %v926, %v948
          %v964 = vsub.f32 %v927, %v948
          %v965 = vmul.f32 %v949, 1.442695
          %v966 = vpow.pop %v965
          %v967 = vmul.f32 %v950, 1.442695
          %v968 = vpow.pop %v967
          %v969 = vmul.f32 %v951, 1.442695
          %v970 = vpow.pop %v969
          %v971 = vmul.f32 %v952, 1.442695
          %v972 = vpow.pop %v971
          %v973 = vmul.f32 %v953, 1.442695
          %v974 = vpow.pop %v973
          %v975 = vmul.f32 %v954, 1.442695
          %v976 = vpow.pop %v975
          %v977 = vmul.f32 %v955, 1.442695
          %v978 = vpow.pop %v977
          %v979 = vmul.f32 %v956, 1.442695
          %v980 = vpow.pop %v979
          %v981 = vmul.f32 %v957, 1.442695
          %v982 = vpow.pop %v981
          %v983 = vmul.f32 %v958, 1.442695
          %v984 = vpow.pop %v983
          %v985 = vmul.f32 %v959, 1.442695
          %v986 = vpow.pop %v985
          %v987 = vmul.f32 %v960, 1.442695
          %v988 = vpow.pop %v987
          %v989 = vmul.f32 %v961, 1.442695
          %v990 = vpow.pop %v989
          %v991 = vmul.f32 %v962, 1.442695
          %v992 = vpow.pop %v991
          %v993 = vmul.f32 %v963, 1.442695
          %v994 = vpow.pop %v993
          %v995 = vmul.f32 %v964, 1.442695
          %v996 = vpow.pop %v995
          %v997 = vadd.f32 %v966, %v968
          %v998 = vadd.f32 %v997, %v970
          %v999 = vadd.f32 %v998, %v972
          %v1000 = vadd.f32 %v999, %v974
          %v1001 = vadd.f32 %v1000, %v976
          %v1002 = vadd.f32 %v1001, %v978
          %v1003 = vadd.f32 %v1002, %v980
          %v1004 = vadd.f32 %v1003, %v982
          %v1005 = vadd.f32 %v1004, %v984
          %v1006 = vadd.f32 %v1005, %v986
          %v1007 = vadd.f32 %v1006, %v988
          %v1008 = vadd.f32 %v1007, %v990
          %v1009 = vadd.f32 %v1008, %v992
          %v1010 = vadd.f32 %v1009, %v994
          %v1011 = vadd.f32 %v1010, %v996
          %v1012 = vrot.slane %v1011, 4
          %v1013 = vadd.f32 %v1011, %v1012
          %v1014 = vrot.slane %v1013, 2
          %v1015 = vadd.f32 %v1013, %v1014
          %v1016 = vrot.slane %v1015, 1
          %v1017 = vadd.f32 %v1015, %v1016
          %v1018 = vpack.c.bf16 %v968, %v966
          %v1019 = vpack.c.bf16 %v972, %v970
          %v1020 = vpack.c.bf16 %v976, %v974
          %v1021 = vpack.c.bf16 %v980, %v978
          %v1022 = vpack.c.bf16 %v984, %v982
          %v1023 = vpack.c.bf16 %v988, %v986
          %v1024 = vpack.c.bf16 %v992, %v990
          %v1025 = vpack.c.bf16 %v996, %v994
          %1026 = vmatprep.subr.bf16.mxu0 0
          %1027 = vmatpush1.bf16.msra.mxu0 %v1018
          %1028 = vmatprep.subr.bf16.mxu0 0
          %1029 = vmatpush1.bf16.msra.mxu0 %v1019
          %1030 = vmatprep.subr.bf16.mxu0 0
          %1031 = vmatpush1.bf16.msra.mxu0 %v1020
          %1032 = vmatprep.subr.bf16.mxu0 0
          %1033 = vmatpush1.bf16.msra.mxu0 %v1021
          %1034 = vmatprep.subr.bf16.mxu0 0
          %1035 = vmatpush1.bf16.msra.mxu0 %v1022
          %1036 = vmatprep.subr.bf16.mxu0 0
          %1037 = vmatpush1.bf16.msra.mxu0 %v1023
          %1038 = vmatprep.subr.bf16.mxu0 0
          %1039 = vmatpush1.bf16.msra.mxu0 %v1024
          %1040 = vmatprep.subr.bf16.mxu0 0
          %1041 = vmatpush1.bf16.msra.mxu0 %v1025
          %1042 = vmatprep.subr.bf16.mxu0 0
          %1043 = vmatpush1.bf16.msra.mxu0 0
          %1044 = vmatprep.subr.bf16.mxu0 0
          %1045 = vmatpush1.bf16.msra.mxu0 0
          %1046 = vmatprep.subr.bf16.mxu0 0
          %1047 = vmatpush1.bf16.msra.mxu0 0
          %1048 = vmatprep.subr.bf16.mxu0 0
          %1049 = vmatpush1.bf16.msra.mxu0 0
          %1050 = vmatprep.subr.bf16.mxu0 0
          %1051 = vmatpush1.bf16.msra.mxu0 0
          %1052 = vmatprep.subr.bf16.mxu0 0
          %1053 = vmatpush1.bf16.msra.mxu0 0
          %1054 = vmatprep.subr.bf16.mxu0 0
          %1055 = vmatpush1.bf16.msra.mxu0 0
          %1056 = vmatprep.subr.bf16.mxu0 0
          %1057 = vmatpush1.bf16.msra.mxu0 0
          %1058 = vmatprep.mubr.bf16.mxu0 0
          %1059 = vmatmul.mubr.bf16.gmra.mrb[0].mxu0 %v740
          %v1060 = vpop.f32.mrb[0].mxu0
          %v1061 = vadd.f32 0.0, %v1060
          %v1062 = vpop.f32.mrb[0].mxu0
          %v1063 = vpop.f32.mrb[0].mxu0
          %v1064 = vadd.f32 0.0, %v1063
          %v1065 = vpop.f32.mrb[0].mxu0
          %1066 = vmatprep.mubr.bf16.mxu0 0
          %1067 = vmatmul.mubr.bf16.gmra.mrb[0].mxu0 %v741
          %v1068 = vpop.f32.mrb[0].mxu0
          %v1069 = vadd.f32 0.0, %v1068
          %v1070 = vpop.f32.mrb[0].mxu0
          %v1071 = vpop.f32.mrb[0].mxu0
          %v1072 = vadd.f32 0.0, %v1071
          %v1073 = vpop.f32.mrb[0].mxu0
          %1074 = vdwg.mxu0
          %v1075 = vrcp.pop %v1017
          %v1076 = vmul.f32 %v1061, %v1075
          %v1077 = vmul.f32 %v1064, %v1075
          %v1078 = vmul.f32 %v1069, %v1075
          %v1079 = vmul.f32 %v1072, %v1075
          %v1080 = vpack.c.bf16 %v1077, %v1076
          %v1081 = vpack.c.bf16 %v1079, %v1078
          %s1082 = smul.addr %s725, 8
          %s1083 = scalar_lea.vmem [#allocation4], %s1082
          %1084 = vst [vmem:[%s1083] sm:$0xff] %v1080
          %1085 = vst [vmem:[%s1083 + $0x8] sm:$0xff] %v1081
        $region49: #{tpu_custom_call.1} parent=35 // loop_footer
          %s723 = sadd.s32 1, %s719
        $region50: #{tpu_custom_call.1} parent=35 // loop_footer_branch
          %718 = sbr.rel target = $region46
        $region51: #{tpu_custom_call.1} parent=35 // loop_exit
          _
        %v1086 = vld [vmem:[%s2] sm:$0xf]
        %v1087 = vld [vmem:[#allocation4] sm:$0xff]
        %v1088 = vld [vmem:[#allocation4 + $0x8] sm:$0xff]
        %v1089 = vld [vmem:[#allocation4 + $0x10] sm:$0xff]
        %v1090 = vld [vmem:[#allocation4 + $0x18] sm:$0xff]
        %v1091 = vld [vmem:[#allocation4 + $0x20] sm:$0xff]
        %v1092 = vld [vmem:[#allocation4 + $0x28] sm:$0xff]
        %v1093 = vld [vmem:[#allocation4 + $0x30] sm:$0xff]
        %v1094 = vld [vmem:[#allocation4 + $0x38] sm:$0xff]
        %1095 = vmatprep.subr.bf16.mxu0 0
        %1096 = vmatpush1.bf16.msra.mxu0 %v1087
        %1097 = vmatprep.subr.bf16.mxu0 0
        %1098 = vmatpush1.bf16.msra.mxu0 %v1088
        %1099 = vmatprep.subr.bf16.mxu0 0
        %1100 = vmatpush1.bf16.msra.mxu0 %v1089
        %1101 = vmatprep.subr.bf16.mxu0 0
        %1102 = vmatpush1.bf16.msra.mxu0 %v1090
        %1103 = vmatprep.subr.bf16.mxu0 0
        %1104 = vmatpush1.bf16.msra.mxu0 %v1091
        %1105 = vmatprep.subr.bf16.mxu0 0
        %1106 = vmatpush1.bf16.msra.mxu0 %v1092
        %1107 = vmatprep.subr.bf16.mxu0 0
        %1108 = vmatpush1.bf16.msra.mxu0 %v1093
        %1109 = vmatprep.subr.bf16.mxu0 0
        %1110 = vmatpush1.bf16.msra.mxu0 %v1094
        %1111 = vmatprep.subr.bf16.mxu0 0
        %1112 = vmatpush1.bf16.msra.mxu0 0
        %1113 = vmatprep.subr.bf16.mxu0 0
        %1114 = vmatpush1.bf16.msra.mxu0 0
        %1115 = vmatprep.subr.bf16.mxu0 0
        %1116 = vmatpush1.bf16.msra.mxu0 0
        %1117 = vmatprep.subr.bf16.mxu0 0
        %1118 = vmatpush1.bf16.msra.mxu0 0
        %1119 = vmatprep.subr.bf16.mxu0 0
        %1120 = vmatpush1.bf16.msra.mxu0 0
        %1121 = vmatprep.subr.bf16.mxu0 0
        %1122 = vmatpush1.bf16.msra.mxu0 0
        %1123 = vmatprep.subr.bf16.mxu0 0
        %1124 = vmatpush1.bf16.msra.mxu0 0
        %1125 = vmatprep.subr.bf16.mxu0 0
        %1126 = vmatpush1.bf16.msra.mxu0 0
        %1127 = vmatprep.mubr.bf16.mxu0 0
        %1128 = vmatmul.mubr.bf16.gmra.mrb[0].mxu0 %v1086
        %v1129 = vpop.f32.mrb[0].mxu0
        %v1130 = vadd.f32 0.0, %v1129
        %v1131 = vpop.f32.mrb[0].mxu0
        %v1132 = vpop.f32.mrb[0].mxu0
        %v1133 = vpop.f32.mrb[0].mxu0
        %1134 = vdwg.mxu0
        %v1135 = vld [vmem:[%s3] sm:$0xff]
        %1137 = vset.pattern.permute.xlu0 0
        %1138 = vperm.xlu0 %1137, %v1135
        %v1139 = vpop.permute.xlu0 %1138
        %v1141 = vadd.f32 %v524, %v1139
        %v1142 = vadd.f32 %v1141, %v1130
        %1143 = vst [vmem:[%s226] sm:$0xff] %v1142
        %s1144 = sand.u32 %s132, 1
        %s1145 = scalar_lea.sflag [#allocation7], %s1144
        %s1146 = sand.u32 %s132, 1
        %s1147 = smul.addr %s1146, 8
        %s1148 = scalar_lea.vmem [#allocation8], %s1147
        // Predicated region
        $region52: #{tpu_custom_call.1} parent=35 // pred_check
          %p1149 = pneg %p142
        $region53: #{tpu_custom_call.1} parent=35 // pred_check_branch
          %1151 = sbr.rel (%p1149) target = $region55
        $region54: #{tpu_custom_call.1} parent=35 // pred_region
          %s1153 = ssub.s32 128, 128
          %1154 = vsyncadd %s1145, %s1153
          %s1155 = sadd.s32 %s26, %s25
          %s1156 = smul.addr %s1155, 128
          %s1157 = scalar_lea.hbm %s4, %s1156
          %s1159 = sshll.u32 %s1148, 4
          %s1160 = int_to_ptr.vmem [resolvable:$true] %s1159
          %1162 = dma.vmem_to_hbm [thread:$0]  %s1160, 128, %s1157, %s1145
        $region55: #{tpu_custom_call.1} parent=35 // pred_fallthru
          _
      $region36: #{tpu_custom_call.1} parent=5 // pred_fallthru
        _
      %p1163 = scmp.le.s32.totalorder 2, %s16
      // Predicated region
      $region56: #{tpu_custom_call.1} parent=5 // pred_check
        %p1164 = pneg %p1163
      $region57: #{tpu_custom_call.1} parent=5 // pred_check_branch
        %1166 = sbr.rel (%p1164) target = $region59
      $region58: #{tpu_custom_call.1} parent=5 // pred_region
        %s1167 = ssub.s32 %s16, 2
        // Predicated region
        $region60: #{tpu_custom_call.1} parent=58 // pred_check
          %p1168 = pneg %p148
        $region61: #{tpu_custom_call.1} parent=58 // pred_check_branch
          %1170 = sbr.rel (%p1168) target = $region63
        $region62: #{tpu_custom_call.1} parent=58 // pred_region
          %s1171 = sand.u32 %s133, 1
          %s1172 = scalar_lea.sflag [#allocation7], %s1171
          %s1173 = sand.u32 %s133, 1
          %s1174 = smul.addr %s1173, 8
          %s1175 = scalar_lea.vmem [#allocation8], %s1174
          %1176 = dma.done %s1172, 128
        $region63: #{tpu_custom_call.1} parent=58 // pred_fallthru
          _
      $region59: #{tpu_custom_call.1} parent=5 // pred_fallthru
        _
    $region6: #{tpu_custom_call.1} parent=1 // loop_footer
      %s20 = sadd.s32 1, %s16
    $region7: #{tpu_custom_call.1} parent=1 // loop_footer_branch
      %15 = sbr.rel target = $region3
    $region8: #{tpu_custom_call.1} parent=1 // loop_exit
      _
    %1177 = vsyncpa [#allocation6], 1
    %s1178 = scalar_lea.sflag [#allocation6], 1
    %1179 = vsyncpa %s1178, 1
    %1180 = vsyncpa [#allocation7], 1
    %s1181 = scalar_lea.sflag [#allocation7], 1
    %1182 = vsyncpa %s1181, 1

</llo_original>
